<compile_context>
chip_gen: v6e
topology: v6e:2x2x1
jax: 0.10.0
libtpu: 0.0.40
codegen_flags: <defaults>
</compile_context>

<pallas_src>
import functools

import jax
import jax.numpy as jnp
from jax import lax
from jax.experimental import pallas as pl
from jax.experimental.pallas import tpu as pltpu

LANES = 128
_PAD_ERR = -1e9  # appended sorted-error padding: elu(x)+1 == exp(x) underflows to exactly 0.


# --------------------------------------------------------------------------------------
# kernel 1: hinge errors (pure elementwise, mem-bound)
# --------------------------------------------------------------------------------------
def _hinge_kernel(logit_ref, label_ref, err_ref):
    x = logit_ref[...]                       # [TR1, 128] f32
    y = label_ref[...]                       # [TR1, 128] f32 (0/1)
    err_ref[...] = 1.0 - x * (2.0 * y - 1.0)


# --------------------------------------------------------------------------------------
# kernel 2: Lovasz reduction over the globally sorted errors / co-sorted labels
# --------------------------------------------------------------------------------------
def _lovasz_kernel(prefix_ref, err_ref, gt_ref, tril_ref, trir_ref, out_ref, *, num_tiles):
    i = pl.program_id(0)
    e = err_ref[...]                         # [TR, 128] sorted errors (desc, row-major)
    gt = gt_ref[...]                         # [TR, 128] co-sorted binary labels (f32 0/1)
    tr = e.shape[0]

    carry = prefix_ref[i].astype(jnp.float32)         # positives in tiles before this one
    G = prefix_ref[num_tiles].astype(jnp.float32)     # total number of positives

    # ---- in-tile global inclusive cumsum of gt (row-major) on the MXU ----
    # lane-inclusive cumsum: (gt @ upper-tri)[r, c] = sum_{c'<=c} gt[r, c']
    within = jnp.dot(gt, tril_ref[...], preferred_element_type=jnp.float32)       # [TR,128]
    row_tot = within[:, LANES - 1:LANES]                                           # [TR,1]
    # exclusive cross-row prefix: strictly-lower-tri [TR,TR] @ [TR,1] matvec
    row_prefix = jnp.dot(trir_ref[...], row_tot, preferred_element_type=jnp.float32)
    s = within + row_prefix + carry          # global inclusive cumsum of gt at each position

    row = lax.broadcasted_iota(jnp.int32, (tr, LANES), 0)
    col = lax.broadcasted_iota(jnp.int32, (tr, LANES), 1)
    gidx = (i * tr + row) * LANES + col      # global sorted position (int32)
    # TODO(synk): f32 index/cumsum lose exact integer representation past ~16.7M elements.
    cnt = gidx.astype(jnp.float32) + 1.0

    # ---- Lovasz gradient with a single (approx + 1 Newton step) reciprocal ----
    #   union_k   U_k = G + cnt_k - s_k            (intersection I_k = G - s_k, U-I = cnt)
    #   jaccard_k     = cnt_k / U_k
    #   grad_k        = jaccard_k - jaccard_{k-1}  (grad_0 = jaccard_0)
    U = G + cnt - s
    U_prev = U - 1.0 + gt                    # = U_{k-1}
    first = gidx == 0
    U_prev = jnp.where(first, 1.0, U_prev)   # avoid 0 denominator when G == 0 at position 0
    prev_num = jnp.where(first, 0.0, cnt - 1.0)
    denom = U * U_prev                       # always >= 1
    r = pl.reciprocal(denom, approx=True)    # EUP
    r = r * (2.0 - denom * r)                # one Newton step (VPU) -> near-exact
    grad = (cnt * U_prev - prev_num * U) * r

    # elu(err) + 1 ; exp argument clamped so padded errors contribute exactly 0
    f = jnp.where(e > 0.0, e + 1.0, jnp.exp(jnp.minimum(e, 0.0)))

    contrib = f * grad                                           # [TR, 128]
    partial = jnp.sum(contrib, axis=0, keepdims=True)            # [1, 128]
    row_id = lax.broadcasted_iota(jnp.int32, (8, LANES), 0)
    out_ref[...] = jnp.where(row_id == 0,
                             jnp.broadcast_to(partial, (8, LANES)),
                             0.0)                                # lane-dense (8,128) block


# --------------------------------------------------------------------------------------
# tiling
# --------------------------------------------------------------------------------------
def _tiling(num_elems):
    """Return (tr1, nt1, tr2, nt2, r_pad): lane-dense, multiple-of-8 row blocks."""
    rows = max(1, -(-num_elems // LANES))
    # kernel-2 tiles: up to 512 rows (64K elems) per tile
    nt2 = max(1, -(-rows // 512))
    tr2 = ((-(-rows // nt2) + 7) // 8) * 8
    r_pad = tr2 * nt2
    # kernel-1 (elementwise) tiles: merge adjacent kernel-2 tiles up to ~1024 rows
    merge = 1
    for cand in range(min(nt2, max(1, 1024 // tr2)), 0, -1):
        if nt2 % cand == 0:
            merge = cand
            break
    return tr2 * merge, nt2 // merge, tr2, nt2, r_pad


# --------------------------------------------------------------------------------------
# wrapper
# --------------------------------------------------------------------------------------
def lovasz_hinge_loss(logits, labels, ignore_index=None):
    # ignore_index is accepted for API parity; the reference code never uses it.
    del ignore_index
    logits = jnp.asarray(logits, jnp.float32).reshape(-1)
    labels = jnp.asarray(labels, jnp.float32).reshape(-1)
    n = logits.shape[0]

    tr1, nt1, tr2, nt2, r_pad = _tiling(n)
    n_pad = r_pad * LANES
    pad = n_pad - n

    logits2d = jnp.pad(logits, (0, pad)).reshape(r_pad, LANES)
    labels2d = jnp.pad(labels, (0, pad)).reshape(r_pad, LANES)

    # ---- kernel 1: hinge errors (elementwise, parallel / megacore-shardable) ----
    errors2d = pl.pallas_call(
        _hinge_kernel,
        out_shape=jax.ShapeDtypeStruct((r_pad, LANES), jnp.float32),
        grid=(nt1,),
        in_specs=[pl.BlockSpec((tr1, LANES), lambda i: (i, 0)),
                  pl.BlockSpec((tr1, LANES), lambda i: (i, 0))],
        out_specs=pl.BlockSpec((tr1, LANES), lambda i: (i, 0)),
        compiler_params=pltpu.CompilerParams(dimension_semantics=("parallel",)),
    )(logits2d, labels2d)

    # TODO(synk): the global descending sort (torch.sort) has no clean Pallas TPU equivalent;
    # done with a single co-sorting lax.sort over only the n real elements (no perm gather).
    errors = errors2d.reshape(-1)[:n]
    neg_sorted, gt_sorted = lax.sort((-errors, labels), dimension=0, num_keys=1)
    errors_sorted = jnp.pad(-neg_sorted, (0, pad), constant_values=_PAD_ERR)
    gt_sorted = jnp.pad(gt_sorted, (0, pad))

    err2d = errors_sorted.reshape(r_pad, LANES)
    gt2d = gt_sorted.reshape(r_pad, LANES)

    # Exclusive per-tile positive-count prefix (+ total G) -> SMEM scalar prefetch.
    # Removes the sequential cumsum carry, so the kernel-2 grid is fully parallel.
    tile_pos = jnp.sum(gt2d.reshape(nt2, tr2 * LANES), axis=1)
    gt_prefix = jnp.concatenate([jnp.zeros((1,), jnp.float32), jnp.cumsum(tile_pos)])
    gt_prefix = gt_prefix.astype(jnp.int32)            # exact: labels are 0/1

    # Triangular constants, passed as resident VMEM inputs (constant index_map):
    tri_lane = jnp.triu(jnp.ones((LANES, LANES), jnp.float32))       # inclusive lane cumsum
    tri_row = jnp.tril(jnp.ones((tr2, tr2), jnp.float32), k=-1)      # exclusive row prefix

    # ---- kernel 2: per-tile Lovasz partial sums (parallel grid, lane-dense output) ----
    partials = pl.pallas_call(
        functools.partial(_lovasz_kernel, num_tiles=nt2),
        out_shape=jax.ShapeDtypeStruct((nt2 * 8, LANES), jnp.float32),
        grid_spec=pltpu.PrefetchScalarGridSpec(
            num_scalar_prefetch=1,
            grid=(nt2,),
            in_specs=[pl.BlockSpec((tr2, LANES), lambda i, p: (i, 0)),
                      pl.BlockSpec((tr2, LANES), lambda i, p: (i, 0)),
                      pl.BlockSpec((LANES, LANES), lambda i, p: (0, 0)),  # resident constant
                      pl.BlockSpec((tr2, tr2), lambda i, p: (0, 0))],     # resident constant
            out_specs=pl.BlockSpec((8, LANES), lambda i, p: (i, 0)),
        ),
        compiler_params=pltpu.CompilerParams(dimension_semantics=("parallel",)),
    )(gt_prefix, err2d, gt2d, tri_lane, tri_row)

    return jnp.sum(partials)


# --------------------------------------------------------------------------------------
# pure-JAX reference mirroring the PyTorch lovasz_hinge_flat
# --------------------------------------------------------------------------------------
def _reference(logits, labels):
    logits = jnp.asarray(logits, jnp.float32).reshape(-1)
    labels = jnp.asarray(labels, jnp.float32).reshape(-1)
    signs = 2.0 * labels - 1.0
    errors = 1.0 - logits * signs
    errors_sorted, perm = lax.top_k(errors, errors.shape[0])
    gt_sorted = labels[perm]
    gts = gt_sorted.sum()
    intersection = gts - jnp.cumsum(gt_sorted)
    union = gts + jnp.cumsum(1.0 - gt_sorted)
    jaccard = 1.0 - intersection / union
    grad = jnp.concatenate([jaccard[:1], jaccard[1:] - jaccard[:-1]])
    return jnp.dot(jax.nn.elu(errors_sorted) + 1.0, grad)


if __name__ == "__main__":
    key = jax.random.PRNGKey(0)
    k1, k2 = jax.random.split(key)

    B, H, W = 2, 16, 16                      # P = 512 predictions
    logits = jax.random.normal(k1, (B, H, W), dtype=jnp.float32)
    labels = (jax.random.uniform(k2, (B, H, W)) > 0.5).astype(jnp.float32)

    loss_fn = jax.jit(lovasz_hinge_loss)
    out = jax.block_until_ready(loss_fn(logits, labels))

    ref = _reference(logits, labels)
    assert jnp.allclose(out, ref, rtol=1e-4, atol=1e-4), (out, ref)

    print("KERNEL_OK")
</pallas_src>

<mosaic_0001>
module attributes {stable_mosaic.version = 11 : i64} {
  func.func @_hinge_kernel(%arg0: i32, %arg1: memref<8x128xf32, #tpu.memory_space<vmem>>, %arg2: memref<8x128xf32, #tpu.memory_space<vmem>>, %arg3: memref<8x128xf32, #tpu.memory_space<vmem>>) attributes {dimension_semantics = [#tpu.dimension_semantics<parallel>], iteration_bounds = array<i64: 1>, scalar_prefetch = 0 : i64, scratch_operands = 0 : i64, tpu.core_type = #tpu.core_type<tc>, window_params = [{transform_indices = @transform_0, window_bounds = array<i64: 8, 128>}, {transform_indices = @transform_1, window_bounds = array<i64: 8, 128>}, {transform_indices = @transform_2, window_bounds = array<i64: 8, 128>}]} {
    %c0 = arith.constant 0 : index
    %c0_0 = arith.constant 0 : index
    %0 = vector.load %arg1[%c0, %c0_0] : memref<8x128xf32, #tpu.memory_space<vmem>>, vector<8x128xf32>
    %c0_1 = arith.constant 0 : index
    %c0_2 = arith.constant 0 : index
    %1 = vector.load %arg2[%c0_1, %c0_2] : memref<8x128xf32, #tpu.memory_space<vmem>>, vector<8x128xf32>
    %cst = arith.constant 2.000000e+00 : f32
    %2 = vector.broadcast %cst : f32 to vector<8x128xf32>
    %3 = arith.mulf %2, %1 : vector<8x128xf32>
    %cst_3 = arith.constant 1.000000e+00 : f32
    %4 = vector.broadcast %cst_3 : f32 to vector<8x128xf32>
    %5 = arith.subf %3, %4 : vector<8x128xf32>
    %6 = arith.mulf %0, %5 : vector<8x128xf32>
    %cst_4 = arith.constant 1.000000e+00 : f32
    %7 = vector.broadcast %cst_4 : f32 to vector<8x128xf32>
    %8 = arith.subf %7, %6 : vector<8x128xf32>
    %c0_5 = arith.constant 0 : index
    %c0_6 = arith.constant 0 : index
    %9 = vector.load %arg3[%c0_5, %c0_6] : memref<8x128xf32, #tpu.memory_space<vmem>>, vector<8x128xf32>
    tpu.vector_store %arg3[%c0_5, %c0_6], %8 {strides = array<i32>} : memref<8x128xf32, #tpu.memory_space<vmem>>, vector<8x128xf32>,
    return
  }
  func.func @transform_0(%arg0: i32) -> (i32, i32) {
    %c0_i32 = arith.constant 0 : i32
    %c0_i32_0 = arith.constant 0 : i32
    return %arg0, %c0_i32 : i32, i32
  }
  func.func @transform_1(%arg0: i32) -> (i32, i32) {
    %c0_i32 = arith.constant 0 : i32
    %c0_i32_0 = arith.constant 0 : i32
    return %arg0, %c0_i32 : i32, i32
  }
  func.func @transform_2(%arg0: i32) -> (i32, i32) {
    %c0_i32 = arith.constant 0 : i32
    %c0_i32_0 = arith.constant 0 : i32
    return %arg0, %c0_i32 : i32, i32
  }
}

module attributes {stable_mosaic.version = 11 : i64} {
  func.func @_lovasz_kernel(%arg0: i32, %arg1: memref<2xi32, #tpu.memory_space<smem>>, %arg2: memref<8x128xf32, #tpu.memory_space<vmem>>, %arg3: memref<8x128xf32, #tpu.memory_space<vmem>>, %arg4: memref<128x128xf32, #tpu.memory_space<vmem>>, %arg5: memref<8x8xf32, #tpu.memory_space<vmem>>, %arg6: memref<8x128xf32, #tpu.memory_space<vmem>>) attributes {dimension_semantics = [#tpu.dimension_semantics<parallel>], iteration_bounds = array<i64: 1>, scalar_prefetch = 1 : i64, scratch_operands = 0 : i64, tpu.core_type = #tpu.core_type<tc>, window_params = [{transform_indices = @transform_0, window_bounds = array<i64: 8, 128>}, {transform_indices = @transform_1, window_bounds = array<i64: 8, 128>}, {pipeline_mode = #tpu.pipeline_mode<synchronous>, transform_indices = @transform_2, window_bounds = array<i64: 128, 128>}, {pipeline_mode = #tpu.pipeline_mode<synchronous>, transform_indices = @transform_3, window_bounds = array<i64: 8, 8>}, {transform_indices = @transform_4, window_bounds = array<i64: 8, 128>}]} {
    %c0 = arith.constant 0 : index
    %c0_0 = arith.constant 0 : index
    %0 = vector.load %arg2[%c0, %c0_0] : memref<8x128xf32, #tpu.memory_space<vmem>>, vector<8x128xf32>
    %c0_1 = arith.constant 0 : index
    %c0_2 = arith.constant 0 : index
    %1 = vector.load %arg3[%c0_1, %c0_2] : memref<8x128xf32, #tpu.memory_space<vmem>>, vector<8x128xf32>
    %2 = arith.index_cast %arg0 : i32 to index
    %3 = memref.load %arg1[%2] : memref<2xi32, #tpu.memory_space<smem>>
    %4 = arith.sitofp %3 : i32 to f32
    %c1 = arith.constant 1 : index
    %5 = memref.load %arg1[%c1] : memref<2xi32, #tpu.memory_space<smem>>
    %6 = arith.sitofp %5 : i32 to f32
    %c0_3 = arith.constant 0 : index
    %c0_4 = arith.constant 0 : index
    %7 = vector.load %arg4[%c0_3, %c0_4] : memref<128x128xf32, #tpu.memory_space<vmem>>, vector<128x128xf32>
    %cst = arith.constant dense<0.000000e+00> : vector<8x128xf32>
    %8 = tpu.matmul %1, %7, %cst {dimension_numbers = #tpu.dot_dimension_numbers<[1], [0], [0], [1], [0, 0, 1, 1], [], []>} : vector<8x128xf32>, vector<128x128xf32>, vector<8x128xf32> -> vector<8x128xf32>
    %9 = vector.extract_strided_slice %8 {offsets = [0, 127], sizes = [8, 1], strides = [1, 1]} : vector<8x128xf32> to vector<8x1xf32>
    %c0_5 = arith.constant 0 : index
    %c0_6 = arith.constant 0 : index
    %10 = vector.load %arg5[%c0_5, %c0_6] : memref<8x8xf32, #tpu.memory_space<vmem>>, vector<8x8xf32>
    %cst_7 = arith.constant dense<0.000000e+00> : vector<8x1xf32>
    %11 = tpu.matmul %10, %9, %cst_7 {dimension_numbers = #tpu.dot_dimension_numbers<[1], [0], [0], [1], [0, 0, 1, 1], [], []>} : vector<8x8xf32>, vector<8x1xf32>, vector<8x1xf32> -> vector<8x1xf32>
    %12 = vector.broadcast %11 : vector<8x1xf32> to vector<8x128xf32>
    %13 = arith.addf %8, %12 : vector<8x128xf32>
    %14 = vector.broadcast %4 : f32 to vector<8x128xf32>
    %15 = arith.addf %13, %14 : vector<8x128xf32>
    %16 = tpu.iota {dimensions = array<i32: 0>} : vector<8x128xi32>
    %17 = tpu.iota {dimensions = array<i32: 1>} : vector<8x128xi32>
    %c8_i32 = arith.constant 8 : i32
    %18 = arith.muli %arg0, %c8_i32 : i32
    %19 = vector.broadcast %18 : i32 to vector<8x128xi32>
    %20 = arith.addi %19, %16 : vector<8x128xi32>
    %c128_i32 = arith.constant 128 : i32
    %21 = vector.broadcast %c128_i32 : i32 to vector<8x128xi32>
    %22 = arith.muli %20, %21 : vector<8x128xi32>
    %23 = arith.addi %22, %17 : vector<8x128xi32>
    %24 = arith.sitofp %23 : vector<8x128xi32> to vector<8x128xf32>
    %cst_8 = arith.constant 1.000000e+00 : f32
    %25 = vector.broadcast %cst_8 : f32 to vector<8x128xf32>
    %26 = arith.addf %24, %25 : vector<8x128xf32>
    %27 = vector.broadcast %6 : f32 to vector<8x128xf32>
    %28 = arith.addf %27, %26 : vector<8x128xf32>
    %29 = arith.subf %28, %15 : vector<8x128xf32>
    %cst_9 = arith.constant 1.000000e+00 : f32
    %30 = vector.broadcast %cst_9 : f32 to vector<8x128xf32>
    %31 = arith.subf %29, %30 : vector<8x128xf32>
    %32 = arith.addf %31, %1 : vector<8x128xf32>
    %c0_i32 = arith.constant 0 : i32
    %33 = vector.broadcast %c0_i32 : i32 to vector<8x128xi32>
    %34 = arith.cmpi eq, %23, %33 : vector<8x128xi32>
    %cst_10 = arith.constant 1.000000e+00 : f32
    %35 = vector.broadcast %cst_10 : f32 to vector<8x128xf32>
    %36 = arith.select %34, %35, %32 : vector<8x128xi1>, vector<8x128xf32>
    %cst_11 = arith.constant 1.000000e+00 : f32
    %37 = vector.broadcast %cst_11 : f32 to vector<8x128xf32>
    %38 = arith.subf %26, %37 : vector<8x128xf32>
    %cst_12 = arith.constant 0.000000e+00 : f32
    %39 = vector.broadcast %cst_12 : f32 to vector<8x128xf32>
    %40 = arith.select %34, %39, %38 : vector<8x128xi1>, vector<8x128xf32>
    %41 = arith.mulf %29, %36 : vector<8x128xf32>
    %42 = tpu.reciprocal %41 {approx = true} : vector<8x128xf32> -> vector<8x128xf32>
    %43 = arith.mulf %41, %42 : vector<8x128xf32>
    %cst_13 = arith.constant 2.000000e+00 : f32
    %44 = vector.broadcast %cst_13 : f32 to vector<8x128xf32>
    %45 = arith.subf %44, %43 : vector<8x128xf32>
    %46 = arith.mulf %42, %45 : vector<8x128xf32>
    %47 = arith.mulf %26, %36 : vector<8x128xf32>
    %48 = arith.mulf %40, %29 : vector<8x128xf32>
    %49 = arith.subf %47, %48 : vector<8x128xf32>
    %50 = arith.mulf %49, %46 : vector<8x128xf32>
    %cst_14 = arith.constant 0.000000e+00 : f32
    %51 = vector.broadcast %cst_14 : f32 to vector<8x128xf32>
    %52 = arith.cmpf ogt, %0, %51 : vector<8x128xf32>
    %cst_15 = arith.constant 1.000000e+00 : f32
    %53 = vector.broadcast %cst_15 : f32 to vector<8x128xf32>
    %54 = arith.addf %0, %53 : vector<8x128xf32>
    %cst_16 = arith.constant 0.000000e+00 : f32
    %55 = vector.broadcast %cst_16 : f32 to vector<8x128xf32>
    %56 = arith.minimumf %0, %55 : vector<8x128xf32>
    %57 = math.exp %56 : vector<8x128xf32>
    %58 = arith.select %52, %54, %57 : vector<8x128xi1>, vector<8x128xf32>
    %59 = arith.mulf %58, %50 : vector<8x128xf32>
    %cst_17 = arith.constant dense<0.000000e+00> : vector<128xf32>
    %60 = vector.multi_reduction <add>, %59, %cst_17 [0] : vector<8x128xf32> to vector<128xf32>
    %61 = vector.shape_cast %60 : vector<128xf32> to vector<1x128xf32>
    %62 = tpu.iota {dimensions = array<i32: 0>} : vector<8x128xi32>
    %c0_i32_18 = arith.constant 0 : i32
    %63 = vector.broadcast %c0_i32_18 : i32 to vector<8x128xi32>
    %64 = arith.cmpi eq, %62, %63 : vector<8x128xi32>
    %65 = vector.shape_cast %61 : vector<1x128xf32> to vector<1x128xf32>
    %66 = vector.broadcast %65 : vector<1x128xf32> to vector<8x128xf32>
    %cst_19 = arith.constant 0.000000e+00 : f32
    %67 = vector.broadcast %cst_19 : f32 to vector<8x128xf32>
    %68 = arith.select %64, %66, %67 : vector<8x128xi1>, vector<8x128xf32>
    %c0_20 = arith.constant 0 : index
    %c0_21 = arith.constant 0 : index
    %69 = vector.load %arg6[%c0_20, %c0_21] : memref<8x128xf32, #tpu.memory_space<vmem>>, vector<8x128xf32>
    tpu.vector_store %arg6[%c0_20, %c0_21], %68 {strides = array<i32>} : memref<8x128xf32, #tpu.memory_space<vmem>>, vector<8x128xf32>,
    return
  }
  func.func @transform_0(%arg0: i32, %arg1: memref<2xi32, #tpu.memory_space<smem>>) -> (i32, i32) {
    %c0_i32 = arith.constant 0 : i32
    %c0_i32_0 = arith.constant 0 : i32
    return %arg0, %c0_i32 : i32, i32
  }
  func.func @transform_1(%arg0: i32, %arg1: memref<2xi32, #tpu.memory_space<smem>>) -> (i32, i32) {
    %c0_i32 = arith.constant 0 : i32
    %c0_i32_0 = arith.constant 0 : i32
    return %arg0, %c0_i32 : i32, i32
  }
  func.func @transform_2(%arg0: i32, %arg1: memref<2xi32, #tpu.memory_space<smem>>) -> (i32, i32) {
    %c0_i32 = arith.constant 0 : i32
    %c0_i32_0 = arith.constant 0 : i32
    %c0_i32_1 = arith.constant 0 : i32
    return %c0_i32, %c0_i32_0 : i32, i32
  }
  func.func @transform_3(%arg0: i32, %arg1: memref<2xi32, #tpu.memory_space<smem>>) -> (i32, i32) {
    %c0_i32 = arith.constant 0 : i32
    %c0_i32_0 = arith.constant 0 : i32
    %c0_i32_1 = arith.constant 0 : i32
    return %c0_i32, %c0_i32_0 : i32, i32
  }
  func.func @transform_4(%arg0: i32, %arg1: memref<2xi32, #tpu.memory_space<smem>>) -> (i32, i32) {
    %c0_i32 = arith.constant 0 : i32
    %c0_i32_0 = arith.constant 0 : i32
    return %arg0, %c0_i32 : i32, i32
  }
}

</mosaic_0001>

<llo_original>
// kernel: neg.3
$region0: #{neg.3}
  #allocation0 [shape = 's32[1]{0}', space=sflag, size = 0x4, scoped, tag = 'scoped memory for neg.3']
  %s0 = inlined_call_operand.vmem [shape: f32[512], index: 0, kind: input, shape index: {}]
  %s1 = inlined_call_operand.vmem [shape: f32[512], index: 1, kind: output, shape index: {}]
  %v2 = vld [vmem:[%s0] sm:$0xf]
  %3 = xla_tuple %v2
  %4 = xla_tuple %3
  %v5 = vxor.u32 %v2, 2147483648
  %6 = xla_tuple %v5
  %7 = vst [vmem:[%s1] sm:$0xf] %v5

// kernel: lovasz_hinge_loss.2
$region0: #{lovasz_hinge_loss.2}
  #allocation0 [shape = 'u32[]', space=smem, size = 0x4, offset = 0x4, fixed_abs, tag = 'smem constant byte address 0x4 - core index']
  #allocation1 [shape = 'u32[144,128]{1,0:T(1,128)}', space=vmem, size = 0x12000, scoped, tag = 'internal scratch']
  %s0 = inlined_call_operand.vmem [shape: f32[8,128], index: 0, kind: input, shape index: {}]
  %s1 = inlined_call_operand.vmem [shape: f32[8,128], index: 1, kind: input, shape index: {}]
  %s2 = inlined_call_operand.vmem [shape: f32[8,128], index: 2, kind: output, shape index: {}]
  %s3 = sld [smem:[#allocation0]]
  $region18: #{lovasz_hinge_loss.2} parent=0
    _
  %s5 = ssub.s32 1, %s3
  %s6 = scalar_select 0, %s5, %s3
  // Predicated region
  $region2: #{lovasz_hinge_loss.2} parent=0 // pred_check
    _
  $region3: #{lovasz_hinge_loss.2} parent=0 // pred_check_branch
    %8 = sbr.rel (0) target = $region5
  $region4: #{lovasz_hinge_loss.2} parent=0 // pred_region
    _
  $region5: #{lovasz_hinge_loss.2} parent=0 // pred_fallthru
    _
  // Predicated region
  $region6: #{lovasz_hinge_loss.2} parent=0 // pred_check
    _
  $region7: #{lovasz_hinge_loss.2} parent=0 // pred_check_branch
    %10 = sbr.rel (0) target = $region9
  $region8: #{lovasz_hinge_loss.2} parent=0 // pred_region
    _
  $region9: #{lovasz_hinge_loss.2} parent=0 // pred_fallthru
    _
  %v11 = vld [vmem:[%s0] sm:$0xff]
  %v12 = vld [vmem:[%s1] sm:$0xff]
  %v13 = vmul.f32 %v12, 2.0
  %v14 = vsub.f32 %v13, 1.0
  %v15 = vmul.f32 %v11, %v14
  %v16 = vsub.f32 1.0, %v15
  %17 = vst [vmem:[%s2] sm:$0xff] %v16
  // Predicated region
  $region10: #{lovasz_hinge_loss.2} parent=0 // pred_check
    _
  $region11: #{lovasz_hinge_loss.2} parent=0 // pred_check_branch
    %19 = sbr.rel (0) target = $region13
  $region12: #{lovasz_hinge_loss.2} parent=0 // pred_region
    _
  $region13: #{lovasz_hinge_loss.2} parent=0 // pred_fallthru
    _
  // Predicated region
  $region14: #{lovasz_hinge_loss.2} parent=0 // pred_check
    _
  $region15: #{lovasz_hinge_loss.2} parent=0 // pred_check_branch
    %21 = sbr.rel (0) target = $region17
  $region16: #{lovasz_hinge_loss.2} parent=0 // pred_region
    _
  $region17: #{lovasz_hinge_loss.2} parent=0 // pred_fallthru
    _

// kernel: lovasz_hinge_loss.3
$region0: #{lovasz_hinge_loss.3}
  #allocation0 [shape = 'u32[]', space=smem, size = 0x4, offset = 0x4, fixed_abs, tag = 'smem constant byte address 0x4 - core index']
  #allocation1 [shape = 'u32[144,128]{1,0:T(1,128)}', space=vmem, size = 0x12000, scoped, tag = 'internal scratch']
  #allocation2 [shape = 's32[1]{0}', space=sflag, size = 0x4, scoped, tag = 'scoped memory for lovasz_hinge_loss.3']
  #allocation3 [shape = 'u8[512]{0}', space=smem, size = 0x200, scoped, tag = 'prefetched SMEM operand 0']
  %s0 = inlined_call_operand.vmem [shape: s32[2], index: 0, kind: input, shape index: {}]
  %s1 = inlined_call_operand.vmem [shape: f32[8,128], index: 1, kind: input, shape index: {}]
  %s2 = inlined_call_operand.vmem [shape: f32[8,128], index: 2, kind: input, shape index: {}]
  %s3 = inlined_call_operand.vmem [shape: f32[128,128], index: 3, kind: input, shape index: {}]
  %s4 = inlined_call_operand.vmem [shape: f32[8,8], index: 4, kind: input, shape index: {}]
  %s5 = inlined_call_operand.vmem [shape: f32[8,128], index: 5, kind: output, shape index: {}]
  %s6 = sld [smem:[#allocation0]]
  $region26: #{lovasz_hinge_loss.3} parent=0
    _
  %s8 = ssub.s32 1, %s6
  %s9 = scalar_select 0, %s8, %s6
  %s10 = sshll.u32 %s0, 4
  %s11 = int_to_ptr.vmem [resolvable:$true] %s10
  %13 = dma.vmem_to_smem %s11, 16, [#allocation3], [#allocation2]
  %14 = dma.done [#allocation2], 16
  %15 = sfence
  // Predicated region
  $region2: #{lovasz_hinge_loss.3} parent=0 // pred_check
    _
  $region3: #{lovasz_hinge_loss.3} parent=0 // pred_check_branch
    %17 = sbr.rel (0) target = $region5
  $region4: #{lovasz_hinge_loss.3} parent=0 // pred_region
    _
  $region5: #{lovasz_hinge_loss.3} parent=0 // pred_fallthru
    _
  // Predicated region
  $region6: #{lovasz_hinge_loss.3} parent=0 // pred_check
    _
  $region7: #{lovasz_hinge_loss.3} parent=0 // pred_check_branch
    %19 = sbr.rel (0) target = $region9
  $region8: #{lovasz_hinge_loss.3} parent=0 // pred_region
    _
  $region9: #{lovasz_hinge_loss.3} parent=0 // pred_fallthru
    _
  // Predicated region
  $region10: #{lovasz_hinge_loss.3} parent=0 // pred_check
    _
  $region11: #{lovasz_hinge_loss.3} parent=0 // pred_check_branch
    %21 = sbr.rel (0) target = $region13
  $region12: #{lovasz_hinge_loss.3} parent=0 // pred_region
    _
  $region13: #{lovasz_hinge_loss.3} parent=0 // pred_fallthru
    _
  // Predicated region
  $region14: #{lovasz_hinge_loss.3} parent=0 // pred_check
    _
  $region15: #{lovasz_hinge_loss.3} parent=0 // pred_check_branch
    %23 = sbr.rel (0) target = $region17
  $region16: #{lovasz_hinge_loss.3} parent=0 // pred_region
    _
  $region17: #{lovasz_hinge_loss.3} parent=0 // pred_fallthru
    _
  %v24 = vld [vmem:[%s1] sm:$0xff]
  %v25 = vld [vmem:[%s2] sm:$0xff]
  %s26 = sld [smem:[#allocation3]]
  %s27 = scvt.s32.f32 %s26
  %s28 = sld [smem:[#allocation3 + $0x1]]
  %s29 = scvt.s32.f32 %s28
  %v30 = vld [vmem:[%s3] sm:$0xff]
  %v31 = vld [vmem:[%s3 + $0x8] sm:$0xff]
  %v32 = vld [vmem:[%s3 + $0x10] sm:$0xff]
  %v33 = vld [vmem:[%s3 + $0x18] sm:$0xff]
  %v34 = vld [vmem:[%s3 + $0x20] sm:$0xff]
  %v35 = vld [vmem:[%s3 + $0x28] sm:$0xff]
  %v36 = vld [vmem:[%s3 + $0x30] sm:$0xff]
  %v37 = vld [vmem:[%s3 + $0x38] sm:$0xff]
  %v38 = vld [vmem:[%s3 + $0x40] sm:$0xff]
  %v39 = vld [vmem:[%s3 + $0x48] sm:$0xff]
  %v40 = vld [vmem:[%s3 + $0x50] sm:$0xff]
  %v41 = vld [vmem:[%s3 + $0x58] sm:$0xff]
  %v42 = vld [vmem:[%s3 + $0x60] sm:$0xff]
  %v43 = vld [vmem:[%s3 + $0x68] sm:$0xff]
  %v44 = vld [vmem:[%s3 + $0x70] sm:$0xff]
  %v45 = vld [vmem:[%s3 + $0x78] sm:$0xff]
  %46 = vmatprep.subr.mxu0 0.0
  %47 = vmatpush1.msra.mxu0 %v45
  %48 = vmatprep.subr.mxu0 0.0
  %49 = vmatpush1.msra.mxu0 %v44
  %50 = vmatprep.subr.mxu0 0.0
  %51 = vmatpush1.msra.mxu0 %v43
  %52 = vmatprep.subr.mxu0 0.0
  %53 = vmatpush1.msra.mxu0 %v42
  %54 = vmatprep.subr.mxu0 0.0
  %55 = vmatpush1.msra.mxu0 %v41
  %56 = vmatprep.subr.mxu0 0.0
  %57 = vmatpush1.msra.mxu0 %v40
  %58 = vmatprep.subr.mxu0 0.0
  %59 = vmatpush1.msra.mxu0 %v39
  %60 = vmatprep.subr.mxu0 0.0
  %61 = vmatpush1.msra.mxu0 %v38
  %62 = vmatprep.subr.mxu0 0.0
  %63 = vmatpush1.msra.mxu0 %v37
  %64 = vmatprep.subr.mxu0 0.0
  %65 = vmatpush1.msra.mxu0 %v36
  %66 = vmatprep.subr.mxu0 0.0
  %67 = vmatpush1.msra.mxu0 %v35
  %68 = vmatprep.subr.mxu0 0.0
  %69 = vmatpush1.msra.mxu0 %v34
  %70 = vmatprep.subr.mxu0 0.0
  %71 = vmatpush1.msra.mxu0 %v33
  %72 = vmatprep.subr.mxu0 0.0
  %73 = vmatpush1.msra.mxu0 %v32
  %74 = vmatprep.subr.mxu0 0.0
  %75 = vmatpush1.msra.mxu0 %v31
  %76 = vmatprep.subr.mxu0 0.0
  %77 = vmatpush1.msra.mxu0 %v30
  %78 = vmatprep.subr.mxu0 0.0
  %79 = vmatpush2.msra.mxu0 0.0
  %80 = vmatprep.subr.mxu0 0.0
  %81 = vmatpush2.msra.mxu0 0.0
  %82 = vmatprep.subr.mxu0 0.0
  %83 = vmatpush2.msra.mxu0 0.0
  %84 = vmatprep.subr.mxu0 0.0
  %85 = vmatpush2.msra.mxu0 0.0
  %86 = vmatprep.subr.mxu0 0.0
  %87 = vmatpush2.msra.mxu0 0.0
  %88 = vmatprep.subr.mxu0 0.0
  %89 = vmatpush2.msra.mxu0 0.0
  %90 = vmatprep.subr.mxu0 0.0
  %91 = vmatpush2.msra.mxu0 0.0
  %92 = vmatprep.subr.mxu0 0.0
  %93 = vmatpush2.msra.mxu0 0.0
  %94 = vmatprep.subr.mxu0 0.0
  %95 = vmatpush2.msra.mxu0 0.0
  %96 = vmatprep.subr.mxu0 0.0
  %97 = vmatpush2.msra.mxu0 0.0
  %98 = vmatprep.subr.mxu0 0.0
  %99 = vmatpush2.msra.mxu0 0.0
  %100 = vmatprep.subr.mxu0 0.0
  %101 = vmatpush2.msra.mxu0 0.0
  %102 = vmatprep.subr.mxu0 0.0
  %103 = vmatpush2.msra.mxu0 0.0
  %104 = vmatprep.subr.mxu0 0.0
  %105 = vmatpush2.msra.mxu0 0.0
  %106 = vmatprep.subr.mxu0 0.0
  %107 = vmatpush2.msra.mxu0 0.0
  %108 = vmatprep.subr.mxu0 0.0
  %109 = vmatpush2.msra.mxu0 0.0
  %110 = vmatprep.mubr.f32.mxu0 0.0
  %111 = vmatmul.mubr.f32.gmra.mxu0 %v25
  %v112 = vpop.f32.mrf.mxu0
  %v113 = vadd.f32 0.0, %v112
  %v114 = vpop.f32.mrf.mxu0
  %115 = vdwg.mxu0
  %v116 = vld [vmem:[%s4] sm:$0xff]
  %118 = vrot.lane.b32.xlu0 %v113, 1
  %v119 = vpop.permute.xlu0 %118
  %vm121 = vcmask 64512
  %v123 = vsel %vm121, %v116, 0
  %125 = vmatprep.subr.mxu0 0.0
  %126 = vmatpush1.msra.mxu0 0.0
  %127 = vmatprep.subr.mxu0 0.0
  %128 = vmatpush1.msra.mxu0 0.0
  %129 = vmatprep.subr.mxu0 0.0
  %130 = vmatpush1.msra.mxu0 0.0
  %131 = vmatprep.subr.mxu0 0.0
  %132 = vmatpush1.msra.mxu0 0.0
  %133 = vmatprep.subr.mxu0 0.0
  %134 = vmatpush1.msra.mxu0 0.0
  %135 = vmatprep.subr.mxu0 0.0
  %136 = vmatpush1.msra.mxu0 0.0
  %137 = vmatprep.subr.mxu0 0.0
  %138 = vmatpush1.msra.mxu0 0.0
  %139 = vmatprep.subr.mxu0 0.0
  %140 = vmatpush1.msra.mxu0 0.0
  %141 = vmatprep.subr.mxu0 0.0
  %142 = vmatpush1.msra.mxu0 0.0
  %143 = vmatprep.subr.mxu0 0.0
  %144 = vmatpush1.msra.mxu0 0.0
  %145 = vmatprep.subr.mxu0 0.0
  %146 = vmatpush1.msra.mxu0 0.0
  %147 = vmatprep.subr.mxu0 0.0
  %148 = vmatpush1.msra.mxu0 0.0
  %149 = vmatprep.subr.mxu0 0.0
  %150 = vmatpush1.msra.mxu0 0.0
  %151 = vmatprep.subr.mxu0 0.0
  %152 = vmatpush1.msra.mxu0 0.0
  %153 = vmatprep.subr.mxu0 0.0
  %154 = vmatpush1.msra.mxu0 0.0
  %155 = vmatprep.subr.mxu0 0.0
  %156 = vmatpush1.msra.mxu0 %v119
  %157 = vmatprep.subr.mxu0 0.0
  %158 = vmatpush2.msra.mxu0 0.0
  %159 = vmatprep.subr.mxu0 0.0
  %160 = vmatpush2.msra.mxu0 0.0
  %161 = vmatprep.subr.mxu0 0.0
  %162 = vmatpush2.msra.mxu0 0.0
  %163 = vmatprep.subr.mxu0 0.0
  %164 = vmatpush2.msra.mxu0 0.0
  %165 = vmatprep.subr.mxu0 0.0
  %166 = vmatpush2.msra.mxu0 0.0
  %167 = vmatprep.subr.mxu0 0.0
  %168 = vmatpush2.msra.mxu0 0.0
  %169 = vmatprep.subr.mxu0 0.0
  %170 = vmatpush2.msra.mxu0 0.0
  %171 = vmatprep.subr.mxu0 0.0
  %172 = vmatpush2.msra.mxu0 0.0
  %173 = vmatprep.subr.mxu0 0.0
  %174 = vmatpush2.msra.mxu0 0.0
  %175 = vmatprep.subr.mxu0 0.0
  %176 = vmatpush2.msra.mxu0 0.0
  %177 = vmatprep.subr.mxu0 0.0
  %178 = vmatpush2.msra.mxu0 0.0
  %179 = vmatprep.subr.mxu0 0.0
  %180 = vmatpush2.msra.mxu0 0.0
  %181 = vmatprep.subr.mxu0 0.0
  %182 = vmatpush2.msra.mxu0 0.0
  %183 = vmatprep.subr.mxu0 0.0
  %184 = vmatpush2.msra.mxu0 0.0
  %185 = vmatprep.subr.mxu0 0.0
  %186 = vmatpush2.msra.mxu0 0.0
  %187 = vmatprep.subr.mxu0 0.0
  %188 = vmatpush2.msra.mxu0 0.0
  %189 = vmatprep.mubr.f32.mxu0 0.0
  %190 = vmatmul.mubr.f32.gmra.mxu0 %v123
  %v191 = vpop.f32.mrf.mxu0
  %v192 = vadd.f32 0.0, %v191
  %v193 = vpop.f32.mrf.mxu0
  %194 = vdwg.mxu0
  %196 = vset.pattern.permute.xlu0 0
  %197 = vperm.xlu0 %196, %v192
  %v198 = vpop.permute.xlu0 %197
  %v200 = vadd.f32 %v113, %v198
  %v201 = vstv %s27
  %v202 = vadd.f32 %v200, %v201
  %v203 = vlaneseq
  %v204 = vshrl.u32 %v203, 7
  %v205 = vlaneseq
  %v206 = vand.u32 %v205, 127
  %s207 = smul.u32 0, 8
  %v208 = vstv %s207
  %v209 = vadd.s32 %v208, %v204
  %v210 = vmul.u32 %v209, 128
  %v211 = vadd.s32 %v210, %v206
  %v212 = vcvt.s32.f32 %v211
  %v213 = vadd.f32 %v212, 1.0
  %v214 = vstv %s29
  %v215 = vadd.f32 %v214, %v213
  %v216 = vsub.f32 %v215, %v202
  %v217 = vsub.f32 %v216, 1.0
  %v218 = vadd.f32 %v217, %v25
  %vm219 = vcmp.eq.s32.totalorder %v211, 0
  %v220 = vsel %vm219, 1.0, %v218
  %v221 = vsub.f32 %v213, 1.0
  %v222 = vsel %vm219, 0.0, %v221
  %v223 = vmul.f32 %v216, %v220
  %v224 = vrcp.pop %v223
  %v225 = vmul.f32 %v223, %v224
  %v226 = vsub.f32 2.0, %v225
  %v227 = vmul.f32 %v224, %v226
  %v228 = vmul.f32 %v213, %v220
  %v229 = vmul.f32 %v222, %v216
  %v230 = vsub.f32 %v228, %v229
  %v231 = vmul.f32 %v230, %v227
  %vm232 = vcmp.gt.f32.partialorder %v24, 0.0
  %v233 = vadd.f32 %v24, 1.0
  %v234 = vmin.f32 %v24, 0.0
  %v235 = vmul.f32 %v234, 1.442695
  %v236 = vpow.pop %v235
  %v237 = vsel %vm232, %v233, %v236
  %v238 = vmul.f32 %v237, %v231
  %v239 = vrot.slane %v238, 4
  %v240 = vadd.f32 %v238, %v239
  %v241 = vrot.slane %v240, 2
  %v242 = vadd.f32 %v240, %v241
  %v243 = vrot.slane %v242, 1
  %v244 = vadd.f32 %v242, %v243
  %vm245 = vcmp.eq.s32.totalorder %v204, 0
  %v246 = vsel %vm245, %v244, 0.0
  %247 = vst [vmem:[%s5] sm:$0xff] %v246
  // Predicated region
  $region18: #{lovasz_hinge_loss.3} parent=0 // pred_check
    _
  $region19: #{lovasz_hinge_loss.3} parent=0 // pred_check_branch
    %249 = sbr.rel (0) target = $region21
  $region20: #{lovasz_hinge_loss.3} parent=0 // pred_region
    _
  $region21: #{lovasz_hinge_loss.3} parent=0 // pred_fallthru
    _
  // Predicated region
  $region22: #{lovasz_hinge_loss.3} parent=0 // pred_check
    _
  $region23: #{lovasz_hinge_loss.3} parent=0 // pred_check_branch
    %251 = sbr.rel (0) target = $region25
  $region24: #{lovasz_hinge_loss.3} parent=0 // pred_region
    _
  $region25: #{lovasz_hinge_loss.3} parent=0 // pred_fallthru
    _

</llo_original>
